<compile_context>
chip_gen: v6e
topology: v6e:2x2x1
jax: 0.10.0
libtpu: 0.0.40
codegen_flags: <defaults>
</compile_context>

<pallas_src>
import functools

import jax
import jax.numpy as jnp
from jax.experimental import pallas as pl
from jax.experimental.pallas import tpu as pltpu

WINDOW_SIZES = (2, 3, 4)


def text_cnn_kernel(emb_ref, wcat_ref, b2_ref, b3_ref, b4_ref,
                    fcw2_ref, fcw3_ref, fcw4_ref, fcb_ref, out_ref,
                    *, batch, max_len, num_filters):
    F = num_filters
    L = max_len

    # Single fused MXU matmul: (batch*L, D) @ (D, 128-padded).  Column group
    # [col_{h,k} : col_{h,k}+F] holds the window-h, tap-k Conv1d weights.
    y = jnp.dot(emb_ref[...], wcat_ref[...], preferred_element_type=jnp.float32)
    y3 = y.reshape(batch, L, y.shape[-1])                    # (batch, L, 128)

    col = 0
    pooled = []
    for h, b_ref in ((2, b2_ref), (3, b3_ref), (4, b4_ref)):
        lh = L - h + 1
        # Shift-add the per-tap column groups back into the conv output (VPU work).
        acc = y3[:, 0:lh, col:col + F]
        for k in range(1, h):
            acc = acc + y3[:, k:k + lh, col + k * F: col + (k + 1) * F]
        col += h * F
        m = jnp.max(acc, axis=1)                             # global max over time: (batch, F)
        pooled.append(jnp.maximum(m + b_ref[...], 0.0))      # bias + ReLU post-pool

    # Linear layer as three slice-dots (no lane-axis concat); class axis padded to
    # 128 lanes so the single output store is unmasked / lane-dense.
    out = (jnp.dot(pooled[0], fcw2_ref[...], preferred_element_type=jnp.float32)
           + jnp.dot(pooled[1], fcw3_ref[...], preferred_element_type=jnp.float32)
           + jnp.dot(pooled[2], fcw4_ref[...], preferred_element_type=jnp.float32)
           + fcb_ref[...])
    out_ref[...] = out.astype(out_ref.dtype)


def text_cnn_forward(emb, params, num_class, *, batch_tile=None):
    """emb: (B, L, D) float32 embeddings (dropout already applied / identity in eval)."""
    B, L, D = emb.shape
    F = params["w2"].shape[-1]
    bt = B if batch_tile is None else batch_tile
    assert B % bt == 0, "batch must divide evenly into batch tiles"

    # Fused conv weight: all (window, tap) weights concatenated on the lane (N) axis,
    # zero-padded to a multiple of 128 lanes.
    taps = []
    for key in ("w2", "w3", "w4"):
        w = params[key]                                      # (h, D, F)
        taps.extend(w[k] for k in range(w.shape[0]))
    wcat = jnp.concatenate(taps, axis=1)                     # (D, 9F)
    n_pad = -(-wcat.shape[1] // 128) * 128
    wcat = jnp.pad(wcat, ((0, 0), (0, n_pad - wcat.shape[1])))

    # FC weight split per window + class axis zero-padded to 128 lanes.
    c_pad = -(-num_class // 128) * 128
    fcw = params["fcw"]                                      # (3F, C)
    fcw_parts = [jnp.pad(fcw[i * F:(i + 1) * F], ((0, 0), (0, c_pad - num_class)))
                 for i in range(len(WINDOW_SIZES))]
    fcb_pad = jnp.pad(params["fcb"], ((0, 0), (0, c_pad - num_class)))

    emb2d = emb.reshape(B * L, D)                            # batch folded into MXU M dim

    kernel = functools.partial(text_cnn_kernel, batch=bt, max_len=L, num_filters=F)

    # TODO(synk): for v6e/v7x production use, cast emb2d / wcat / fcw to bfloat16
    # (keeping f32 accumulation); kept f32 here to match the f32 reference at 1e-4.
    out = pl.pallas_call(
        kernel,
        out_shape=jax.ShapeDtypeStruct((B, c_pad), jnp.float32),
        grid=(B // bt,),
        in_specs=[
            pl.BlockSpec((bt * L, D), lambda i: (i, 0)),
            pl.BlockSpec(wcat.shape, lambda i: (0, 0)),
            pl.BlockSpec(params["b2"].shape, lambda i: (0, 0)),
            pl.BlockSpec(params["b3"].shape, lambda i: (0, 0)),
            pl.BlockSpec(params["b4"].shape, lambda i: (0, 0)),
            pl.BlockSpec(fcw_parts[0].shape, lambda i: (0, 0)),
            pl.BlockSpec(fcw_parts[1].shape, lambda i: (0, 0)),
            pl.BlockSpec(fcw_parts[2].shape, lambda i: (0, 0)),
            pl.BlockSpec(fcb_pad.shape, lambda i: (0, 0)),
        ],
        out_specs=pl.BlockSpec((bt, c_pad), lambda i: (i, 0)),
        compiler_params=pltpu.CompilerParams(dimension_semantics=("parallel",)),
    )(emb2d, wcat, params["b2"], params["b3"], params["b4"],
      fcw_parts[0], fcw_parts[1], fcw_parts[2], fcb_pad)
    return out[:, :num_class]


def reference_forward(emb, params):
    """Pure-JAX reference mirroring the PyTorch module (eval mode)."""
    outs = []
    L = emb.shape[1]
    for h, wk, bk in ((2, "w2", "b2"), (3, "w3", "b3"), (4, "w4", "b4")):
        w = params[wk]           # (h, D, F)
        b = params[bk][0]        # (F,)
        lh = L - h + 1
        conv = sum(jnp.einsum("bld,df->blf", emb[:, k:k + lh, :], w[k])
                   for k in range(h)) + b
        conv = jnp.maximum(conv, 0.0)
        outs.append(jnp.max(conv, axis=1))      # (B, F)
    feat = jnp.concatenate(outs, axis=1)        # (B, 3F)
    return feat @ params["fcw"] + params["fcb"][0]


if __name__ == "__main__":
    # Small, module-consistent shapes
    vocab_size = 50
    num_class = 4
    max_len = 16
    batch = 2
    embedding_dim = 128
    num_filters = 12

    key = jax.random.PRNGKey(0)
    k_emb, k_tok, kw2, kb2, kw3, kb3, kw4, kb4, kfw, kfb = jax.random.split(key, 10)

    # Deterministic synthetic parameter init (not a checkpoint load)
    emb_table = 0.1 * jax.random.normal(k_emb, (vocab_size, embedding_dim), jnp.float32)
    emb_table = emb_table.at[0].set(0.0)  # padding_idx=0 -> zero row

    params = {
        "w2": 0.1 * jax.random.normal(kw2, (2, embedding_dim, num_filters), jnp.float32),
        "b2": 0.1 * jax.random.normal(kb2, (1, num_filters), jnp.float32),
        "w3": 0.1 * jax.random.normal(kw3, (3, embedding_dim, num_filters), jnp.float32),
        "b3": 0.1 * jax.random.normal(kb3, (1, num_filters), jnp.float32),
        "w4": 0.1 * jax.random.normal(kw4, (4, embedding_dim, num_filters), jnp.float32),
        "b4": 0.1 * jax.random.normal(kb4, (1, num_filters), jnp.float32),
        "fcw": 0.1 * jax.random.normal(kfw, (num_filters * len(WINDOW_SIZES), num_class), jnp.float32),
        "fcb": 0.1 * jax.random.normal(kfb, (1, num_class), jnp.float32),
    }

    tokens = jax.random.randint(k_tok, (batch, max_len), 0, vocab_size, jnp.int32)

    # Embedding lookup (gather) kept as plain-JAX glue; dropout is identity in eval mode.
    # TODO(synk): training-mode dropout (stochastic mask) not implemented; inference semantics only.
    emb = jnp.take(emb_table, tokens, axis=0)  # (B, L, D)

    out = text_cnn_forward(emb, params, num_class)
    out = jax.block_until_ready(out)

    ref = reference_forward(emb, params)
    assert out.shape == (batch, num_class)
    assert jnp.allclose(out, ref, atol=1e-4, rtol=1e-4), (out, ref)

    print("KERNEL_OK")
</pallas_src>

<mosaic_0001>
module attributes {stable_mosaic.version = 11 : i64} {
  func.func @text_cnn_kernel(%arg0: i32, %arg1: memref<32x128xf32, #tpu.memory_space<vmem>>, %arg2: memref<128x128xf32, #tpu.memory_space<vmem>>, %arg3: memref<1x12xf32, #tpu.memory_space<vmem>>, %arg4: memref<1x12xf32, #tpu.memory_space<vmem>>, %arg5: memref<1x12xf32, #tpu.memory_space<vmem>>, %arg6: memref<12x128xf32, #tpu.memory_space<vmem>>, %arg7: memref<12x128xf32, #tpu.memory_space<vmem>>, %arg8: memref<12x128xf32, #tpu.memory_space<vmem>>, %arg9: memref<1x128xf32, #tpu.memory_space<vmem>>, %arg10: memref<2x128xf32, #tpu.memory_space<vmem>>) attributes {dimension_semantics = [#tpu.dimension_semantics<parallel>], iteration_bounds = array<i64: 1>, scalar_prefetch = 0 : i64, scratch_operands = 0 : i64, tpu.core_type = #tpu.core_type<tc>, window_params = [{transform_indices = @transform_0, window_bounds = array<i64: 32, 128>}, {pipeline_mode = #tpu.pipeline_mode<synchronous>, transform_indices = @transform_1, window_bounds = array<i64: 128, 128>}, {pipeline_mode = #tpu.pipeline_mode<synchronous>, transform_indices = @transform_2, window_bounds = array<i64: 1, 12>}, {pipeline_mode = #tpu.pipeline_mode<synchronous>, transform_indices = @transform_3, window_bounds = array<i64: 1, 12>}, {pipeline_mode = #tpu.pipeline_mode<synchronous>, transform_indices = @transform_4, window_bounds = array<i64: 1, 12>}, {pipeline_mode = #tpu.pipeline_mode<synchronous>, transform_indices = @transform_5, window_bounds = array<i64: 12, 128>}, {pipeline_mode = #tpu.pipeline_mode<synchronous>, transform_indices = @transform_6, window_bounds = array<i64: 12, 128>}, {pipeline_mode = #tpu.pipeline_mode<synchronous>, transform_indices = @transform_7, window_bounds = array<i64: 12, 128>}, {pipeline_mode = #tpu.pipeline_mode<synchronous>, transform_indices = @transform_8, window_bounds = array<i64: 1, 128>}, {transform_indices = @transform_9, window_bounds = array<i64: 2, 128>}]} {
    %c0 = arith.constant 0 : index
    %c0_0 = arith.constant 0 : index
    %0 = vector.load %arg1[%c0, %c0_0] : memref<32x128xf32, #tpu.memory_space<vmem>>, vector<32x128xf32>
    %c0_1 = arith.constant 0 : index
    %c0_2 = arith.constant 0 : index
    %1 = vector.load %arg2[%c0_1, %c0_2] : memref<128x128xf32, #tpu.memory_space<vmem>>, vector<128x128xf32>
    %cst = arith.constant dense<0.000000e+00> : vector<32x128xf32>
    %2 = tpu.matmul %0, %1, %cst {dimension_numbers = #tpu.dot_dimension_numbers<[1], [0], [0], [1], [0, 0, 1, 1], [], []>} : vector<32x128xf32>, vector<128x128xf32>, vector<32x128xf32> -> vector<32x128xf32>
    %3 = vector.shape_cast %2 : vector<32x128xf32> to vector<2x16x128xf32>
    %4 = vector.extract_strided_slice %3 {offsets = [0, 0, 0], sizes = [2, 15, 12], strides = [1, 1, 1]} : vector<2x16x128xf32> to vector<2x15x12xf32>
    %5 = vector.extract_strided_slice %3 {offsets = [0, 1, 12], sizes = [2, 15, 12], strides = [1, 1, 1]} : vector<2x16x128xf32> to vector<2x15x12xf32>
    %6 = arith.addf %4, %5 : vector<2x15x12xf32>
    %cst_3 = arith.constant dense<0xFF800000> : vector<2x12xf32>
    %7 = vector.multi_reduction <maximumf>, %6, %cst_3 [1] : vector<2x15x12xf32> to vector<2x12xf32>
    %c0_4 = arith.constant 0 : index
    %c0_5 = arith.constant 0 : index
    %8 = vector.load %arg3[%c0_4, %c0_5] : memref<1x12xf32, #tpu.memory_space<vmem>>, vector<1x12xf32>
    %9 = vector.broadcast %8 : vector<1x12xf32> to vector<2x12xf32>
    %10 = arith.addf %7, %9 : vector<2x12xf32>
    %cst_6 = arith.constant 0.000000e+00 : f32
    %11 = vector.broadcast %cst_6 : f32 to vector<2x12xf32>
    %12 = arith.maximumf %10, %11 : vector<2x12xf32>
    %13 = vector.extract_strided_slice %3 {offsets = [0, 0, 24], sizes = [2, 14, 12], strides = [1, 1, 1]} : vector<2x16x128xf32> to vector<2x14x12xf32>
    %14 = vector.extract_strided_slice %3 {offsets = [0, 1, 36], sizes = [2, 14, 12], strides = [1, 1, 1]} : vector<2x16x128xf32> to vector<2x14x12xf32>
    %15 = arith.addf %13, %14 : vector<2x14x12xf32>
    %16 = vector.extract_strided_slice %3 {offsets = [0, 2, 48], sizes = [2, 14, 12], strides = [1, 1, 1]} : vector<2x16x128xf32> to vector<2x14x12xf32>
    %17 = arith.addf %15, %16 : vector<2x14x12xf32>
    %cst_7 = arith.constant dense<0xFF800000> : vector<2x12xf32>
    %18 = vector.multi_reduction <maximumf>, %17, %cst_7 [1] : vector<2x14x12xf32> to vector<2x12xf32>
    %c0_8 = arith.constant 0 : index
    %c0_9 = arith.constant 0 : index
    %19 = vector.load %arg4[%c0_8, %c0_9] : memref<1x12xf32, #tpu.memory_space<vmem>>, vector<1x12xf32>
    %20 = vector.broadcast %19 : vector<1x12xf32> to vector<2x12xf32>
    %21 = arith.addf %18, %20 : vector<2x12xf32>
    %cst_10 = arith.constant 0.000000e+00 : f32
    %22 = vector.broadcast %cst_10 : f32 to vector<2x12xf32>
    %23 = arith.maximumf %21, %22 : vector<2x12xf32>
    %24 = vector.extract_strided_slice %3 {offsets = [0, 0, 60], sizes = [2, 13, 12], strides = [1, 1, 1]} : vector<2x16x128xf32> to vector<2x13x12xf32>
    %25 = vector.extract_strided_slice %3 {offsets = [0, 1, 72], sizes = [2, 13, 12], strides = [1, 1, 1]} : vector<2x16x128xf32> to vector<2x13x12xf32>
    %26 = arith.addf %24, %25 : vector<2x13x12xf32>
    %27 = vector.extract_strided_slice %3 {offsets = [0, 2, 84], sizes = [2, 13, 12], strides = [1, 1, 1]} : vector<2x16x128xf32> to vector<2x13x12xf32>
    %28 = arith.addf %26, %27 : vector<2x13x12xf32>
    %29 = vector.extract_strided_slice %3 {offsets = [0, 3, 96], sizes = [2, 13, 12], strides = [1, 1, 1]} : vector<2x16x128xf32> to vector<2x13x12xf32>
    %30 = arith.addf %28, %29 : vector<2x13x12xf32>
    %cst_11 = arith.constant dense<0xFF800000> : vector<2x12xf32>
    %31 = vector.multi_reduction <maximumf>, %30, %cst_11 [1] : vector<2x13x12xf32> to vector<2x12xf32>
    %c0_12 = arith.constant 0 : index
    %c0_13 = arith.constant 0 : index
    %32 = vector.load %arg5[%c0_12, %c0_13] : memref<1x12xf32, #tpu.memory_space<vmem>>, vector<1x12xf32>
    %33 = vector.broadcast %32 : vector<1x12xf32> to vector<2x12xf32>
    %34 = arith.addf %31, %33 : vector<2x12xf32>
    %cst_14 = arith.constant 0.000000e+00 : f32
    %35 = vector.broadcast %cst_14 : f32 to vector<2x12xf32>
    %36 = arith.maximumf %34, %35 : vector<2x12xf32>
    %c0_15 = arith.constant 0 : index
    %c0_16 = arith.constant 0 : index
    %37 = vector.load %arg6[%c0_15, %c0_16] : memref<12x128xf32, #tpu.memory_space<vmem>>, vector<12x128xf32>
    %cst_17 = arith.constant dense<0.000000e+00> : vector<2x128xf32>
    %38 = tpu.matmul %12, %37, %cst_17 {dimension_numbers = #tpu.dot_dimension_numbers<[1], [0], [0], [1], [0, 0, 1, 1], [], []>} : vector<2x12xf32>, vector<12x128xf32>, vector<2x128xf32> -> vector<2x128xf32>
    %c0_18 = arith.constant 0 : index
    %c0_19 = arith.constant 0 : index
    %39 = vector.load %arg7[%c0_18, %c0_19] : memref<12x128xf32, #tpu.memory_space<vmem>>, vector<12x128xf32>
    %cst_20 = arith.constant dense<0.000000e+00> : vector<2x128xf32>
    %40 = tpu.matmul %23, %39, %cst_20 {dimension_numbers = #tpu.dot_dimension_numbers<[1], [0], [0], [1], [0, 0, 1, 1], [], []>} : vector<2x12xf32>, vector<12x128xf32>, vector<2x128xf32> -> vector<2x128xf32>
    %41 = arith.addf %38, %40 : vector<2x128xf32>
    %c0_21 = arith.constant 0 : index
    %c0_22 = arith.constant 0 : index
    %42 = vector.load %arg8[%c0_21, %c0_22] : memref<12x128xf32, #tpu.memory_space<vmem>>, vector<12x128xf32>
    %cst_23 = arith.constant dense<0.000000e+00> : vector<2x128xf32>
    %43 = tpu.matmul %36, %42, %cst_23 {dimension_numbers = #tpu.dot_dimension_numbers<[1], [0], [0], [1], [0, 0, 1, 1], [], []>} : vector<2x12xf32>, vector<12x128xf32>, vector<2x128xf32> -> vector<2x128xf32>
    %44 = arith.addf %41, %43 : vector<2x128xf32>
    %c0_24 = arith.constant 0 : index
    %c0_25 = arith.constant 0 : index
    %45 = vector.load %arg9[%c0_24, %c0_25] : memref<1x128xf32, #tpu.memory_space<vmem>>, vector<1x128xf32>
    %46 = vector.broadcast %45 : vector<1x128xf32> to vector<2x128xf32>
    %47 = arith.addf %44, %46 : vector<2x128xf32>
    %c0_26 = arith.constant 0 : index
    %c0_27 = arith.constant 0 : index
    %48 = vector.load %arg10[%c0_26, %c0_27] : memref<2x128xf32, #tpu.memory_space<vmem>>, vector<2x128xf32>
    tpu.vector_store %arg10[%c0_26, %c0_27], %47 {strides = array<i32>} : memref<2x128xf32, #tpu.memory_space<vmem>>, vector<2x128xf32>,
    return
  }
  func.func @transform_0(%arg0: i32) -> (i32, i32) {
    %c0_i32 = arith.constant 0 : i32
    %c0_i32_0 = arith.constant 0 : i32
    return %arg0, %c0_i32 : i32, i32
  }
  func.func @transform_1(%arg0: i32) -> (i32, i32) {
    %c0_i32 = arith.constant 0 : i32
    %c0_i32_0 = arith.constant 0 : i32
    %c0_i32_1 = arith.constant 0 : i32
    return %c0_i32, %c0_i32_0 : i32, i32
  }
  func.func @transform_2(%arg0: i32) -> (i32, i32) {
    %c0_i32 = arith.constant 0 : i32
    %c0_i32_0 = arith.constant 0 : i32
    %c0_i32_1 = arith.constant 0 : i32
    return %c0_i32, %c0_i32_0 : i32, i32
  }
  func.func @transform_3(%arg0: i32) -> (i32, i32) {
    %c0_i32 = arith.constant 0 : i32
    %c0_i32_0 = arith.constant 0 : i32
    %c0_i32_1 = arith.constant 0 : i32
    return %c0_i32, %c0_i32_0 : i32, i32
  }
  func.func @transform_4(%arg0: i32) -> (i32, i32) {
    %c0_i32 = arith.constant 0 : i32
    %c0_i32_0 = arith.constant 0 : i32
    %c0_i32_1 = arith.constant 0 : i32
    return %c0_i32, %c0_i32_0 : i32, i32
  }
  func.func @transform_5(%arg0: i32) -> (i32, i32) {
    %c0_i32 = arith.constant 0 : i32
    %c0_i32_0 = arith.constant 0 : i32
    %c0_i32_1 = arith.constant 0 : i32
    return %c0_i32, %c0_i32_0 : i32, i32
  }
  func.func @transform_6(%arg0: i32) -> (i32, i32) {
    %c0_i32 = arith.constant 0 : i32
    %c0_i32_0 = arith.constant 0 : i32
    %c0_i32_1 = arith.constant 0 : i32
    return %c0_i32, %c0_i32_0 : i32, i32
  }
  func.func @transform_7(%arg0: i32) -> (i32, i32) {
    %c0_i32 = arith.constant 0 : i32
    %c0_i32_0 = arith.constant 0 : i32
    %c0_i32_1 = arith.constant 0 : i32
    return %c0_i32, %c0_i32_0 : i32, i32
  }
  func.func @transform_8(%arg0: i32) -> (i32, i32) {
    %c0_i32 = arith.constant 0 : i32
    %c0_i32_0 = arith.constant 0 : i32
    %c0_i32_1 = arith.constant 0 : i32
    return %c0_i32, %c0_i32_0 : i32, i32
  }
  func.func @transform_9(%arg0: i32) -> (i32, i32) {
    %c0_i32 = arith.constant 0 : i32
    %c0_i32_0 = arith.constant 0 : i32
    return %arg0, %c0_i32 : i32, i32
  }
}

</mosaic_0001>

<llo_original>
// kernel: tpu_custom_call.1
$region0: #{tpu_custom_call.1}
  #allocation0 [shape = 'u32[]', space=smem, size = 0x4, offset = 0x4, fixed_abs, tag = 'smem constant byte address 0x4 - core index']
  #allocation1 [shape = 'u32[144,128]{1,0:T(1,128)}', space=vmem, size = 0x12000, scoped, tag = 'internal scratch']
  %s0 = inlined_call_operand.hbm [shape: f32[32,128], index: 0, kind: input, shape index: {}]
  %s1 = inlined_call_operand.hbm [shape: f32[128,128], index: 1, kind: input, shape index: {}]
  %s2 = inlined_call_operand.vmem [shape: f32[1,12], index: 2, kind: input, shape index: {}]
  %s3 = inlined_call_operand.vmem [shape: f32[1,12], index: 3, kind: input, shape index: {}]
  %s4 = inlined_call_operand.vmem [shape: f32[1,12], index: 4, kind: input, shape index: {}]
  %s5 = inlined_call_operand.hbm [shape: f32[12,128], index: 5, kind: input, shape index: {}]
  %s6 = inlined_call_operand.hbm [shape: f32[12,128], index: 6, kind: input, shape index: {}]
  %s7 = inlined_call_operand.hbm [shape: f32[12,128], index: 7, kind: input, shape index: {}]
  %s8 = inlined_call_operand.vmem [shape: f32[1,128], index: 8, kind: input, shape index: {}]
  %s9 = inlined_call_operand.hbm [shape: f32[2,128], index: 9, kind: output, shape index: {}]
  %s10 = sld [smem:[#allocation0]]
  $region66: #{tpu_custom_call.1} parent=0
    _
  %s12 = ssub.s32 1, %s10
  %s13 = scalar_select 0, %s12, %s10
  $region1: #{tpu_custom_call.1} parent=0
    #allocation2 [shape = 'u8[16384]{0}', space=vmem, size = 0x4000, scoped, tag = 'input window, operand 0, single buffered']
    #allocation3 [shape = 's32[1]{0}', space=sflag, size = 0x4, scoped, tag = 'scoped memory for tpu_custom_call.1']
    #allocation4 [shape = 's32[1]{0}', space=sflag, size = 0x4, scoped, tag = 'scoped memory for tpu_custom_call.1']
    #allocation5 [shape = 'u8[65536]{0}', space=vmem, size = 0x10000, scoped, tag = 'input window, operand 1, single buffered']
    #allocation6 [shape = 's32[1]{0}', space=sflag, size = 0x4, scoped, tag = 'scoped memory for tpu_custom_call.1']
    #allocation7 [shape = 'u8[8192]{0}', space=vmem, size = 0x2000, scoped, tag = 'input window, operand 5, single buffered']
    #allocation8 [shape = 'u8[8192]{0}', space=vmem, size = 0x2000, scoped, tag = 'input window, operand 6, single buffered']
    #allocation9 [shape = 's32[1]{0}', space=sflag, size = 0x4, scoped, tag = 'scoped memory for tpu_custom_call.1']
    #allocation10 [shape = 'u8[8192]{0}', space=vmem, size = 0x2000, scoped, tag = 'input window, operand 7, single buffered']
    #allocation11 [shape = 'u8[1024]{0}', space=vmem, size = 0x400, scoped, tag = 'output window, operand 0, single buffered']
    %14 = vsyncpa [#allocation3], 0
    %15 = vsyncpa [#allocation6], 0
    %16 = vsyncpa [#allocation9], 0
    %17 = vsyncpa [#allocation4], 0
    // Predicated region
    $region2: #{tpu_custom_call.1} parent=1 // pred_check
      _
    $region3: #{tpu_custom_call.1} parent=1 // pred_check_branch
      %19 = sbr.rel (0) target = $region5
    $region4: #{tpu_custom_call.1} parent=1 // pred_region
      %s21 = ssub.s32 512, 512
      %22 = vsyncadd [#allocation3], %s21
      %s23 = sshll.u32 [#allocation2], 4
      %s24 = int_to_ptr.vmem [resolvable:$true] %s23
      %29 = dma.hbm_to_vmem [thread:$0]  %s0, 512, %s24, [#allocation3], 128, 128, 8
    $region5: #{tpu_custom_call.1} parent=1 // pred_fallthru
      _
    // Predicated region
    $region6: #{tpu_custom_call.1} parent=1 // pred_check
      _
    $region7: #{tpu_custom_call.1} parent=1 // pred_check_branch
      %31 = sbr.rel (0) target = $region9
    $region8: #{tpu_custom_call.1} parent=1 // pred_region
      %s33 = ssub.s32 2048, 2048
      %34 = vsyncadd [#allocation6], %s33
      %s35 = sshll.u32 [#allocation5], 4
      %s36 = int_to_ptr.vmem [resolvable:$true] %s35
      %41 = dma.hbm_to_vmem [thread:$0]  %s1, 2048, %s36, [#allocation6], 128, 128, 8
    $region9: #{tpu_custom_call.1} parent=1 // pred_fallthru
      _
    // Predicated region
    $region10: #{tpu_custom_call.1} parent=1 // pred_check
      _
    $region11: #{tpu_custom_call.1} parent=1 // pred_check_branch
      %43 = sbr.rel (0) target = $region13
    $region12: #{tpu_custom_call.1} parent=1 // pred_region
      _
    $region13: #{tpu_custom_call.1} parent=1 // pred_fallthru
      _
    // Predicated region
    $region14: #{tpu_custom_call.1} parent=1 // pred_check
      _
    $region15: #{tpu_custom_call.1} parent=1 // pred_check_branch
      %45 = sbr.rel (0) target = $region17
    $region16: #{tpu_custom_call.1} parent=1 // pred_region
      _
    $region17: #{tpu_custom_call.1} parent=1 // pred_fallthru
      _
    // Predicated region
    $region18: #{tpu_custom_call.1} parent=1 // pred_check
      _
    $region19: #{tpu_custom_call.1} parent=1 // pred_check_branch
      %47 = sbr.rel (0) target = $region21
    $region20: #{tpu_custom_call.1} parent=1 // pred_region
      _
    $region21: #{tpu_custom_call.1} parent=1 // pred_fallthru
      _
    // Predicated region
    $region22: #{tpu_custom_call.1} parent=1 // pred_check
      _
    $region23: #{tpu_custom_call.1} parent=1 // pred_check_branch
      %49 = sbr.rel (0) target = $region25
    $region24: #{tpu_custom_call.1} parent=1 // pred_region
      %s51 = ssub.s32 256, 256
      %52 = vsyncadd [#allocation6], %s51
      %s53 = sshll.u32 [#allocation7], 4
      %s54 = int_to_ptr.vmem [resolvable:$true] %s53
      %59 = dma.hbm_to_vmem [thread:$0]  %s5, 256, %s54, [#allocation6], 128, 128, 8
    $region25: #{tpu_custom_call.1} parent=1 // pred_fallthru
      _
    // Predicated region
    $region26: #{tpu_custom_call.1} parent=1 // pred_check
      _
    $region27: #{tpu_custom_call.1} parent=1 // pred_check_branch
      %61 = sbr.rel (0) target = $region29
    $region28: #{tpu_custom_call.1} parent=1 // pred_region
      %s63 = ssub.s32 256, 256
      %64 = vsyncadd [#allocation9], %s63
      %s65 = sshll.u32 [#allocation8], 4
      %s66 = int_to_ptr.vmem [resolvable:$true] %s65
      %71 = dma.hbm_to_vmem [thread:$0]  %s6, 256, %s66, [#allocation9], 128, 128, 8
    $region29: #{tpu_custom_call.1} parent=1 // pred_fallthru
      _
    // Predicated region
    $region30: #{tpu_custom_call.1} parent=1 // pred_check
      _
    $region31: #{tpu_custom_call.1} parent=1 // pred_check_branch
      %73 = sbr.rel (0) target = $region33
    $region32: #{tpu_custom_call.1} parent=1 // pred_region
      %s75 = ssub.s32 256, 256
      %76 = vsyncadd [#allocation9], %s75
      %s77 = sshll.u32 [#allocation10], 4
      %s78 = int_to_ptr.vmem [resolvable:$true] %s77
      %83 = dma.hbm_to_vmem [thread:$0]  %s7, 256, %s78, [#allocation9], 128, 128, 8
    $region33: #{tpu_custom_call.1} parent=1 // pred_fallthru
      _
    // Predicated region
    $region34: #{tpu_custom_call.1} parent=1 // pred_check
      _
    $region35: #{tpu_custom_call.1} parent=1 // pred_check_branch
      %85 = sbr.rel (0) target = $region37
    $region36: #{tpu_custom_call.1} parent=1 // pred_region
      _
    $region37: #{tpu_custom_call.1} parent=1 // pred_fallthru
      _
    // Predicated region
    $region38: #{tpu_custom_call.1} parent=1 // pred_check
      _
    $region39: #{tpu_custom_call.1} parent=1 // pred_check_branch
      %87 = sbr.rel (0) target = $region41
    $region40: #{tpu_custom_call.1} parent=1 // pred_region
      %88 = dma.done [#allocation3], 512
    $region41: #{tpu_custom_call.1} parent=1 // pred_fallthru
      _
    // Predicated region
    $region42: #{tpu_custom_call.1} parent=1 // pred_check
      _
    $region43: #{tpu_custom_call.1} parent=1 // pred_check_branch
      %90 = sbr.rel (0) target = $region45
    $region44: #{tpu_custom_call.1} parent=1 // pred_region
      %91 = dma.done [#allocation6], 2048
    $region45: #{tpu_custom_call.1} parent=1 // pred_fallthru
      _
    // Predicated region
    $region46: #{tpu_custom_call.1} parent=1 // pred_check
      _
    $region47: #{tpu_custom_call.1} parent=1 // pred_check_branch
      %93 = sbr.rel (0) target = $region49
    $region48: #{tpu_custom_call.1} parent=1 // pred_region
      %94 = dma.done [#allocation6], 256
    $region49: #{tpu_custom_call.1} parent=1 // pred_fallthru
      _
    // Predicated region
    $region50: #{tpu_custom_call.1} parent=1 // pred_check
      _
    $region51: #{tpu_custom_call.1} parent=1 // pred_check_branch
      %96 = sbr.rel (0) target = $region53
    $region52: #{tpu_custom_call.1} parent=1 // pred_region
      %97 = dma.done [#allocation9], 256
    $region53: #{tpu_custom_call.1} parent=1 // pred_fallthru
      _
    // Predicated region
    $region54: #{tpu_custom_call.1} parent=1 // pred_check
      _
    $region55: #{tpu_custom_call.1} parent=1 // pred_check_branch
      %99 = sbr.rel (0) target = $region57
    $region56: #{tpu_custom_call.1} parent=1 // pred_region
      %100 = dma.done [#allocation9], 256
    $region57: #{tpu_custom_call.1} parent=1 // pred_fallthru
      _
    %v101 = vld [vmem:[#allocation2] sm:$0xff]
    %v102 = vld [vmem:[#allocation2 + $0x8] sm:$0xff]
    %v103 = vld [vmem:[#allocation2 + $0x10] sm:$0xff]
    %v104 = vld [vmem:[#allocation2 + $0x18] sm:$0xff]
    %v105 = vld [vmem:[#allocation5] sm:$0xff]
    %v106 = vld [vmem:[#allocation5 + $0x8] sm:$0xff]
    %v107 = vld [vmem:[#allocation5 + $0x10] sm:$0xff]
    %v108 = vld [vmem:[#allocation5 + $0x18] sm:$0xff]
    %v109 = vld [vmem:[#allocation5 + $0x20] sm:$0xff]
    %v110 = vld [vmem:[#allocation5 + $0x28] sm:$0xff]
    %v111 = vld [vmem:[#allocation5 + $0x30] sm:$0xff]
    %v112 = vld [vmem:[#allocation5 + $0x38] sm:$0xff]
    %v113 = vld [vmem:[#allocation5 + $0x40] sm:$0xff]
    %v114 = vld [vmem:[#allocation5 + $0x48] sm:$0xff]
    %v115 = vld [vmem:[#allocation5 + $0x50] sm:$0xff]
    %v116 = vld [vmem:[#allocation5 + $0x58] sm:$0xff]
    %v117 = vld [vmem:[#allocation5 + $0x60] sm:$0xff]
    %v118 = vld [vmem:[#allocation5 + $0x68] sm:$0xff]
    %v119 = vld [vmem:[#allocation5 + $0x70] sm:$0xff]
    %v120 = vld [vmem:[#allocation5 + $0x78] sm:$0xff]
    %121 = vmatprep.subr.mxu0 0.0
    %122 = vmatpush1.msra.mxu0 %v120
    %123 = vmatprep.subr.mxu0 0.0
    %124 = vmatpush1.msra.mxu0 %v119
    %125 = vmatprep.subr.mxu0 0.0
    %126 = vmatpush1.msra.mxu0 %v118
    %127 = vmatprep.subr.mxu0 0.0
    %128 = vmatpush1.msra.mxu0 %v117
    %129 = vmatprep.subr.mxu0 0.0
    %130 = vmatpush1.msra.mxu0 %v116
    %131 = vmatprep.subr.mxu0 0.0
    %132 = vmatpush1.msra.mxu0 %v115
    %133 = vmatprep.subr.mxu0 0.0
    %134 = vmatpush1.msra.mxu0 %v114
    %135 = vmatprep.subr.mxu0 0.0
    %136 = vmatpush1.msra.mxu0 %v113
    %137 = vmatprep.subr.mxu0 0.0
    %138 = vmatpush1.msra.mxu0 %v112
    %139 = vmatprep.subr.mxu0 0.0
    %140 = vmatpush1.msra.mxu0 %v111
    %141 = vmatprep.subr.mxu0 0.0
    %142 = vmatpush1.msra.mxu0 %v110
    %143 = vmatprep.subr.mxu0 0.0
    %144 = vmatpush1.msra.mxu0 %v109
    %145 = vmatprep.subr.mxu0 0.0
    %146 = vmatpush1.msra.mxu0 %v108
    %147 = vmatprep.subr.mxu0 0.0
    %148 = vmatpush1.msra.mxu0 %v107
    %149 = vmatprep.subr.mxu0 0.0
    %150 = vmatpush1.msra.mxu0 %v106
    %151 = vmatprep.subr.mxu0 0.0
    %152 = vmatpush1.msra.mxu0 %v105
    %153 = vmatprep.subr.mxu0 0.0
    %154 = vmatpush2.msra.mxu0 0.0
    %155 = vmatprep.subr.mxu0 0.0
    %156 = vmatpush2.msra.mxu0 0.0
    %157 = vmatprep.subr.mxu0 0.0
    %158 = vmatpush2.msra.mxu0 0.0
    %159 = vmatprep.subr.mxu0 0.0
    %160 = vmatpush2.msra.mxu0 0.0
    %161 = vmatprep.subr.mxu0 0.0
    %162 = vmatpush2.msra.mxu0 0.0
    %163 = vmatprep.subr.mxu0 0.0
    %164 = vmatpush2.msra.mxu0 0.0
    %165 = vmatprep.subr.mxu0 0.0
    %166 = vmatpush2.msra.mxu0 0.0
    %167 = vmatprep.subr.mxu0 0.0
    %168 = vmatpush2.msra.mxu0 0.0
    %169 = vmatprep.subr.mxu0 0.0
    %170 = vmatpush2.msra.mxu0 0.0
    %171 = vmatprep.subr.mxu0 0.0
    %172 = vmatpush2.msra.mxu0 0.0
    %173 = vmatprep.subr.mxu0 0.0
    %174 = vmatpush2.msra.mxu0 0.0
    %175 = vmatprep.subr.mxu0 0.0
    %176 = vmatpush2.msra.mxu0 0.0
    %177 = vmatprep.subr.mxu0 0.0
    %178 = vmatpush2.msra.mxu0 0.0
    %179 = vmatprep.subr.mxu0 0.0
    %180 = vmatpush2.msra.mxu0 0.0
    %181 = vmatprep.subr.mxu0 0.0
    %182 = vmatpush2.msra.mxu0 0.0
    %183 = vmatprep.subr.mxu0 0.0
    %184 = vmatpush2.msra.mxu0 0.0
    %185 = vmatprep.mubr.f32.mxu0 0.0
    %186 = vmatmul.mubr.f32.gmra.mxu0 %v101
    %v187 = vpop.f32.mrf.mxu0
    %v188 = vadd.f32 0.0, %v187
    %v189 = vpop.f32.mrf.mxu0
    %190 = vmatprep.mubr.f32.mxu0 0.0
    %191 = vmatmul.mubr.f32.gmra.mxu0 %v102
    %v192 = vpop.f32.mrf.mxu0
    %v193 = vadd.f32 0.0, %v192
    %v194 = vpop.f32.mrf.mxu0
    %195 = vmatprep.mubr.f32.mxu0 0.0
    %196 = vmatmul.mubr.f32.gmra.mxu0 %v103
    %v197 = vpop.f32.mrf.mxu0
    %v198 = vadd.f32 0.0, %v197
    %v199 = vpop.f32.mrf.mxu0
    %200 = vmatprep.mubr.f32.mxu0 0.0
    %201 = vmatmul.mubr.f32.gmra.mxu0 %v104
    %v202 = vpop.f32.mrf.mxu0
    %v203 = vadd.f32 0.0, %v202
    %v204 = vpop.f32.mrf.mxu0
    %205 = vdwg.mxu0
    %vm210 = vcmask 1046528
    %v211 = vrot.slane %v188, 1
    %v212 = vrot.slane %v193, 1
    %v213 = vsel %vm210, %v211, %v212
    %v214 = vrot.slane %v198, 1
    %v215 = vrot.slane %v203, 1
    %v216 = vsel %vm210, %v214, %v215
    %217 = vrot.lane.b32.xlu0 %v213, 116
    %v218 = vpop.permute.xlu0 %217
    %219 = vrot.lane.b32.xlu0 %v212, 116
    %v220 = vpop.permute.xlu0 %219
    %221 = vrot.lane.b32.xlu0 %v216, 116
    %v222 = vpop.permute.xlu0 %221
    %223 = vrot.lane.b32.xlu0 %v215, 116
    %v224 = vpop.permute.xlu0 %223
    %v229 = vadd.f32 %v188, %v218
    %v230 = vadd.f32 %v193, %v220
    %v231 = vadd.f32 %v198, %v222
    %v232 = vadd.f32 %v203, %v224
    %vm233 = vcmask 97280
    %v234 = vsel %vm233, %v229, -inf
    %vm235 = vcmask 96256
    %v236 = vsel %vm235, %v230, -inf
    %v237 = vmax.f32 %v234, %v236
    %v238 = vrot.slane %v237, 4
    %v239 = vmax.f32 %v237, %v238
    %v240 = vrot.slane %v239, 2
    %v241 = vmax.f32 %v239, %v240
    %v242 = vrot.slane %v241, 1
    %v243 = vmax.f32 %v241, %v242
    %v244 = vsel %vm233, %v231, -inf
    %v245 = vsel %vm235, %v232, -inf
    %v246 = vmax.f32 %v244, %v245
    %v247 = vrot.slane %v246, 4
    %v248 = vmax.f32 %v246, %v247
    %v249 = vrot.slane %v248, 2
    %v250 = vmax.f32 %v248, %v249
    %v251 = vrot.slane %v250, 1
    %v252 = vmax.f32 %v250, %v251
    %v253 = vld [vmem:[%s2] sm:$0x1]
    %v255 = vlaneseq
    %v256 = vshrl.u32 %v255, 7
    %v257 = vsub.s32 0, %v256
    %v258 = vrot.slane %v253, %v257
    %v260 = vadd.f32 %v243, %v258
    %v261 = vadd.f32 %v252, %v258
    %v262 = vmax.f32 %v260, 0.0
    %v263 = vmax.f32 %v261, 0.0
    %vm264 = vcmask 1045504
    %v265 = vrot.slane %v188, 2
    %v266 = vrot.slane %v193, 2
    %v267 = vsel %vm264, %v265, %v266
    %v268 = vrot.slane %v198, 2
    %v269 = vrot.slane %v203, 2
    %v270 = vsel %vm264, %v268, %v269
    %271 = vrot.lane.b32.xlu0 %v267, 104
    %v272 = vpop.permute.xlu0 %271
    %273 = vrot.lane.b32.xlu0 %v266, 104
    %v274 = vpop.permute.xlu0 %273
    %275 = vrot.lane.b32.xlu0 %v270, 104
    %v276 = vpop.permute.xlu0 %275
    %277 = vrot.lane.b32.xlu0 %v269, 104
    %v278 = vpop.permute.xlu0 %277
    %v283 = vadd.f32 %v229, %v272
    %v284 = vadd.f32 %v230, %v274
    %v285 = vadd.f32 %v231, %v276
    %v286 = vadd.f32 %v232, %v278
    %vm287 = vcmask 294080
    %v288 = vsel %vm287, %v283, -inf
    %vm289 = vcmask 292032
    %v290 = vsel %vm289, %v284, -inf
    %v291 = vmax.f32 %v288, %v290
    %v292 = vrot.slane %v291, 4
    %v293 = vmax.f32 %v291, %v292
    %v294 = vrot.slane %v293, 2
    %v295 = vmax.f32 %v293, %v294
    %v296 = vrot.slane %v295, 1
    %v297 = vmax.f32 %v295, %v296
    %v298 = vsel %vm287, %v285, -inf
    %v299 = vsel %vm289, %v286, -inf
    %v300 = vmax.f32 %v298, %v299
    %v301 = vrot.slane %v300, 4
    %v302 = vmax.f32 %v300, %v301
    %v303 = vrot.slane %v302, 2
    %v304 = vmax.f32 %v302, %v303
    %v305 = vrot.slane %v304, 1
    %v306 = vmax.f32 %v304, %v305
    %v307 = vld [vmem:[%s3] sm:$0x1]
    %v309 = vlaneseq
    %v310 = vshrl.u32 %v309, 7
    %v311 = vsub.s32 0, %v310
    %v312 = vrot.slane %v307, %v311
    %313 = vrot.lane.b32.xlu0 %v312, 24
    %v314 = vpop.permute.xlu0 %313
    %v316 = vadd.f32 %v297, %v314
    %v317 = vadd.f32 %v306, %v314
    %v318 = vmax.f32 %v316, 0.0
    %v319 = vmax.f32 %v317, 0.0
    %vm320 = vcmask 1044480
    %v321 = vrot.slane %v188, 3
    %v322 = vrot.slane %v193, 3
    %v323 = vsel %vm320, %v321, %v322
    %v324 = vrot.slane %v198, 3
    %v325 = vrot.slane %v203, 3
    %v326 = vsel %vm320, %v324, %v325
    %327 = vrot.lane.b32.xlu0 %v323, 92
    %v328 = vpop.permute.xlu0 %327
    %329 = vrot.lane.b32.xlu0 %v322, 92
    %v330 = vpop.permute.xlu0 %329
    %331 = vrot.lane.b32.xlu0 %v326, 92
    %v332 = vpop.permute.xlu0 %331
    %333 = vrot.lane.b32.xlu0 %v325, 92
    %v334 = vpop.permute.xlu0 %333
    %v339 = vadd.f32 %v283, %v328
    %v340 = vadd.f32 %v284, %v330
    %v341 = vadd.f32 %v285, %v332
    %v342 = vadd.f32 %v286, %v334
    %vm343 = vcmask 589280
    %v344 = vsel %vm343, %v339, -inf
    %vm345 = vcmask 586208
    %v346 = vsel %vm345, %v340, -inf
    %v347 = vmax.f32 %v344, %v346
    %v348 = vrot.slane %v347, 4
    %v349 = vmax.f32 %v347, %v348
    %v350 = vrot.slane %v349, 2
    %v351 = vmax.f32 %v349, %v350
    %v352 = vrot.slane %v351, 1
    %v353 = vmax.f32 %v351, %v352
    %v354 = vsel %vm343, %v341, -inf
    %v355 = vsel %vm345, %v342, -inf
    %v356 = vmax.f32 %v354, %v355
    %v357 = vrot.slane %v356, 4
    %v358 = vmax.f32 %v356, %v357
    %v359 = vrot.slane %v358, 2
    %v360 = vmax.f32 %v358, %v359
    %v361 = vrot.slane %v360, 1
    %v362 = vmax.f32 %v360, %v361
    %v363 = vld [vmem:[%s4] sm:$0x1]
    %v365 = vlaneseq
    %v366 = vshrl.u32 %v365, 7
    %v367 = vsub.s32 0, %v366
    %v368 = vrot.slane %v363, %v367
    %369 = vrot.lane.b32.xlu0 %v368, 60
    %v370 = vpop.permute.xlu0 %369
    %v372 = vadd.f32 %v353, %v370
    %v373 = vadd.f32 %v362, %v370
    %v374 = vmax.f32 %v372, 0.0
    %v375 = vmax.f32 %v373, 0.0
    %v376 = vld [vmem:[#allocation7] sm:$0xff]
    %v377 = vld [vmem:[#allocation7 + $0x8] sm:$0xf]
    %v378 = vld [vmem:[#allocation8] sm:$0xff]
    %v379 = vld [vmem:[#allocation8 + $0x8] sm:$0xf]
    %v382 = vrot.slane %v319, 7
    %vm383 = vcmask 1041409
    %v384 = vsel %vm383, %v382, %v318
    %385 = vrot.lane.b32.xlu0 %v384, 104
    %v386 = vpop.permute.xlu0 %385
    %v387 = vsel %vm233, %v386, 0
    %vm389 = vcmask 1043456
    %v391 = vsel %vm389, %v379, 0
    %393 = vmatprep.subr.mxu0 0.0
    %394 = vmatpush1.msra.mxu0 0.0
    %395 = vmatprep.subr.mxu0 0.0
    %396 = vmatpush1.msra.mxu0 0.0
    %397 = vmatprep.subr.mxu0 0.0
    %398 = vmatpush1.msra.mxu0 0.0
    %399 = vmatprep.subr.mxu0 0.0
    %400 = vmatpush1.msra.mxu0 0.0
    %401 = vmatprep.subr.mxu0 0.0
    %402 = vmatpush1.msra.mxu0 0.0
    %403 = vmatprep.subr.mxu0 0.0
    %404 = vmatpush1.msra.mxu0 0.0
    %405 = vmatprep.subr.mxu0 0.0
    %406 = vmatpush1.msra.mxu0 0.0
    %407 = vmatprep.subr.mxu0 0.0
    %408 = vmatpush1.msra.mxu0 0.0
    %409 = vmatprep.subr.mxu0 0.0
    %410 = vmatpush1.msra.mxu0 0.0
    %411 = vmatprep.subr.mxu0 0.0
    %412 = vmatpush1.msra.mxu0 0.0
    %413 = vmatprep.subr.mxu0 0.0
    %414 = vmatpush1.msra.mxu0 0.0
    %415 = vmatprep.subr.mxu0 0.0
    %416 = vmatpush1.msra.mxu0 0.0
    %417 = vmatprep.subr.mxu0 0.0
    %418 = vmatpush1.msra.mxu0 0.0
    %419 = vmatprep.subr.mxu0 0.0
    %420 = vmatpush1.msra.mxu0 0.0
    %421 = vmatprep.subr.mxu0 0.0
    %422 = vmatpush1.msra.mxu0 %v391
    %423 = vmatprep.subr.mxu0 0.0
    %424 = vmatpush1.msra.mxu0 %v378
    %425 = vmatprep.subr.mxu0 0.0
    %426 = vmatpush2.msra.mxu0 0.0
    %427 = vmatprep.subr.mxu0 0.0
    %428 = vmatpush2.msra.mxu0 0.0
    %429 = vmatprep.subr.mxu0 0.0
    %430 = vmatpush2.msra.mxu0 0.0
    %431 = vmatprep.subr.mxu0 0.0
    %432 = vmatpush2.msra.mxu0 0.0
    %433 = vmatprep.subr.mxu0 0.0
    %434 = vmatpush2.msra.mxu0 0.0
    %435 = vmatprep.subr.mxu0 0.0
    %436 = vmatpush2.msra.mxu0 0.0
    %437 = vmatprep.subr.mxu0 0.0
    %438 = vmatpush2.msra.mxu0 0.0
    %439 = vmatprep.subr.mxu0 0.0
    %440 = vmatpush2.msra.mxu0 0.0
    %441 = vmatprep.subr.mxu0 0.0
    %442 = vmatpush2.msra.mxu0 0.0
    %443 = vmatprep.subr.mxu0 0.0
    %444 = vmatpush2.msra.mxu0 0.0
    %445 = vmatprep.subr.mxu0 0.0
    %446 = vmatpush2.msra.mxu0 0.0
    %447 = vmatprep.subr.mxu0 0.0
    %448 = vmatpush2.msra.mxu0 0.0
    %449 = vmatprep.subr.mxu0 0.0
    %450 = vmatpush2.msra.mxu0 0.0
    %451 = vmatprep.subr.mxu0 0.0
    %452 = vmatpush2.msra.mxu0 0.0
    %453 = vmatprep.subr.mxu0 0.0
    %454 = vmatpush2.msra.mxu0 0.0
    %455 = vmatprep.subr.mxu0 0.0
    %456 = vmatpush2.msra.mxu0 0.0
    %457 = vmatprep.mubr.f32.mxu0 0.0
    %458 = vmatmul.mubr.f32.gmra.mxu0 %v387
    %v459 = vpop.f32.mrf.mxu0
    %v460 = vadd.f32 0.0, %v459
    %v461 = vpop.f32.mrf.mxu0
    %462 = vdwg.mxu0
    %v465 = vrot.slane %v263, 7
    %v466 = vsel %vm383, %v465, %v262
    %v467 = vsel %vm233, %v466, 0
    %v470 = vsel %vm389, %v377, 0
    %472 = vmatprep.subr.mxu0 0.0
    %473 = vmatpush1.msra.mxu0 0.0
    %474 = vmatprep.subr.mxu0 0.0
    %475 = vmatpush1.msra.mxu0 0.0
    %476 = vmatprep.subr.mxu0 0.0
    %477 = vmatpush1.msra.mxu0 0.0
    %478 = vmatprep.subr.mxu0 0.0
    %479 = vmatpush1.msra.mxu0 0.0
    %480 = vmatprep.subr.mxu0 0.0
    %481 = vmatpush1.msra.mxu0 0.0
    %482 = vmatprep.subr.mxu0 0.0
    %483 = vmatpush1.msra.mxu0 0.0
    %484 = vmatprep.subr.mxu0 0.0
    %485 = vmatpush1.msra.mxu0 0.0
    %486 = vmatprep.subr.mxu0 0.0
    %487 = vmatpush1.msra.mxu0 0.0
    %488 = vmatprep.subr.mxu0 0.0
    %489 = vmatpush1.msra.mxu0 0.0
    %490 = vmatprep.subr.mxu0 0.0
    %491 = vmatpush1.msra.mxu0 0.0
    %492 = vmatprep.subr.mxu0 0.0
    %493 = vmatpush1.msra.mxu0 0.0
    %494 = vmatprep.subr.mxu0 0.0
    %495 = vmatpush1.msra.mxu0 0.0
    %496 = vmatprep.subr.mxu0 0.0
    %497 = vmatpush1.msra.mxu0 0.0
    %498 = vmatprep.subr.mxu0 0.0
    %499 = vmatpush1.msra.mxu0 0.0
    %500 = vmatprep.subr.mxu0 0.0
    %501 = vmatpush1.msra.mxu0 %v470
    %502 = vmatprep.subr.mxu0 0.0
    %503 = vmatpush1.msra.mxu0 %v376
    %504 = vmatprep.subr.mxu0 0.0
    %505 = vmatpush2.msra.mxu0 0.0
    %506 = vmatprep.subr.mxu0 0.0
    %507 = vmatpush2.msra.mxu0 0.0
    %508 = vmatprep.subr.mxu0 0.0
    %509 = vmatpush2.msra.mxu0 0.0
    %510 = vmatprep.subr.mxu0 0.0
    %511 = vmatpush2.msra.mxu0 0.0
    %512 = vmatprep.subr.mxu0 0.0
    %513 = vmatpush2.msra.mxu0 0.0
    %514 = vmatprep.subr.mxu0 0.0
    %515 = vmatpush2.msra.mxu0 0.0
    %516 = vmatprep.subr.mxu0 0.0
    %517 = vmatpush2.msra.mxu0 0.0
    %518 = vmatprep.subr.mxu0 0.0
    %519 = vmatpush2.msra.mxu0 0.0
    %520 = vmatprep.subr.mxu0 0.0
    %521 = vmatpush2.msra.mxu0 0.0
    %522 = vmatprep.subr.mxu0 0.0
    %523 = vmatpush2.msra.mxu0 0.0
    %524 = vmatprep.subr.mxu0 0.0
    %525 = vmatpush2.msra.mxu0 0.0
    %526 = vmatprep.subr.mxu0 0.0
    %527 = vmatpush2.msra.mxu0 0.0
    %528 = vmatprep.subr.mxu0 0.0
    %529 = vmatpush2.msra.mxu0 0.0
    %530 = vmatprep.subr.mxu0 0.0
    %531 = vmatpush2.msra.mxu0 0.0
    %532 = vmatprep.subr.mxu0 0.0
    %533 = vmatpush2.msra.mxu0 0.0
    %534 = vmatprep.subr.mxu0 0.0
    %535 = vmatpush2.msra.mxu0 0.0
    %536 = vmatprep.mubr.f32.mxu0 0.0
    %537 = vmatmul.mubr.f32.gmra.mxu0 %v467
    %v538 = vpop.f32.mrf.mxu0
    %v539 = vadd.f32 %v460, %v538
    %v540 = vpop.f32.mrf.mxu0
    %541 = vdwg.mxu0
    %v542 = vld [vmem:[#allocation10] sm:$0xff]
    %v543 = vld [vmem:[#allocation10 + $0x8] sm:$0xf]
    %v546 = vrot.slane %v375, 7
    %v547 = vsel %vm383, %v546, %v374
    %548 = vrot.lane.b32.xlu0 %v547, 68
    %v549 = vpop.permute.xlu0 %548
    %v550 = vsel %vm233, %v549, 0
    %v553 = vsel %vm389, %v543, 0
    %555 = vmatprep.subr.mxu0 0.0
    %556 = vmatpush1.msra.mxu0 0.0
    %557 = vmatprep.subr.mxu0 0.0
    %558 = vmatpush1.msra.mxu0 0.0
    %559 = vmatprep.subr.mxu0 0.0
    %560 = vmatpush1.msra.mxu0 0.0
    %561 = vmatprep.subr.mxu0 0.0
    %562 = vmatpush1.msra.mxu0 0.0
    %563 = vmatprep.subr.mxu0 0.0
    %564 = vmatpush1.msra.mxu0 0.0
    %565 = vmatprep.subr.mxu0 0.0
    %566 = vmatpush1.msra.mxu0 0.0
    %567 = vmatprep.subr.mxu0 0.0
    %568 = vmatpush1.msra.mxu0 0.0
    %569 = vmatprep.subr.mxu0 0.0
    %570 = vmatpush1.msra.mxu0 0.0
    %571 = vmatprep.subr.mxu0 0.0
    %572 = vmatpush1.msra.mxu0 0.0
    %573 = vmatprep.subr.mxu0 0.0
    %574 = vmatpush1.msra.mxu0 0.0
    %575 = vmatprep.subr.mxu0 0.0
    %576 = vmatpush1.msra.mxu0 0.0
    %577 = vmatprep.subr.mxu0 0.0
    %578 = vmatpush1.msra.mxu0 0.0
    %579 = vmatprep.subr.mxu0 0.0
    %580 = vmatpush1.msra.mxu0 0.0
    %581 = vmatprep.subr.mxu0 0.0
    %582 = vmatpush1.msra.mxu0 0.0
    %583 = vmatprep.subr.mxu0 0.0
    %584 = vmatpush1.msra.mxu0 %v553
    %585 = vmatprep.subr.mxu0 0.0
    %586 = vmatpush1.msra.mxu0 %v542
    %587 = vmatprep.subr.mxu0 0.0
    %588 = vmatpush2.msra.mxu0 0.0
    %589 = vmatprep.subr.mxu0 0.0
    %590 = vmatpush2.msra.mxu0 0.0
    %591 = vmatprep.subr.mxu0 0.0
    %592 = vmatpush2.msra.mxu0 0.0
    %593 = vmatprep.subr.mxu0 0.0
    %594 = vmatpush2.msra.mxu0 0.0
    %595 = vmatprep.subr.mxu0 0.0
    %596 = vmatpush2.msra.mxu0 0.0
    %597 = vmatprep.subr.mxu0 0.0
    %598 = vmatpush2.msra.mxu0 0.0
    %599 = vmatprep.subr.mxu0 0.0
    %600 = vmatpush2.msra.mxu0 0.0
    %601 = vmatprep.subr.mxu0 0.0
    %602 = vmatpush2.msra.mxu0 0.0
    %603 = vmatprep.subr.mxu0 0.0
    %604 = vmatpush2.msra.mxu0 0.0
    %605 = vmatprep.subr.mxu0 0.0
    %606 = vmatpush2.msra.mxu0 0.0
    %607 = vmatprep.subr.mxu0 0.0
    %608 = vmatpush2.msra.mxu0 0.0
    %609 = vmatprep.subr.mxu0 0.0
    %610 = vmatpush2.msra.mxu0 0.0
    %611 = vmatprep.subr.mxu0 0.0
    %612 = vmatpush2.msra.mxu0 0.0
    %613 = vmatprep.subr.mxu0 0.0
    %614 = vmatpush2.msra.mxu0 0.0
    %615 = vmatprep.subr.mxu0 0.0
    %616 = vmatpush2.msra.mxu0 0.0
    %617 = vmatprep.subr.mxu0 0.0
    %618 = vmatpush2.msra.mxu0 0.0
    %619 = vmatprep.mubr.f32.mxu0 0.0
    %620 = vmatmul.mubr.f32.gmra.mxu0 %v550
    %v621 = vpop.f32.mrf.mxu0
    %v622 = vadd.f32 0.0, %v621
    %v623 = vpop.f32.mrf.mxu0
    %624 = vdwg.mxu0
    %v625 = vadd.f32 %v539, %v622
    %v626 = vld [vmem:[%s8] sm:$0x1]
    %v628 = vlaneseq
    %v629 = vshrl.u32 %v628, 7
    %v630 = vsub.s32 0, %v629
    %v631 = vrot.slane %v626, %v630
    %v633 = vadd.f32 %v625, %v631
    %634 = vst [vmem:[#allocation11] sm:$0x3] %v633
    // Predicated region
    $region58: #{tpu_custom_call.1} parent=1 // pred_check
      _
    $region59: #{tpu_custom_call.1} parent=1 // pred_check_branch
      %636 = sbr.rel (0) target = $region61
    $region60: #{tpu_custom_call.1} parent=1 // pred_region
      %s638 = ssub.s32 32, 32
      %639 = vsyncadd [#allocation4], %s638
      %s641 = sshll.u32 [#allocation11], 4
      %s642 = int_to_ptr.vmem [resolvable:$true] %s641
      %644 = dma.vmem_to_hbm [thread:$0]  %s642, 32, %s9, [#allocation4]
    $region61: #{tpu_custom_call.1} parent=1 // pred_fallthru
      _
    // Predicated region
    $region62: #{tpu_custom_call.1} parent=1 // pred_check
      _
    $region63: #{tpu_custom_call.1} parent=1 // pred_check_branch
      %646 = sbr.rel (0) target = $region65
    $region64: #{tpu_custom_call.1} parent=1 // pred_region
      %647 = dma.done [#allocation4], 32
    $region65: #{tpu_custom_call.1} parent=1 // pred_fallthru
      _
    %648 = vsyncpa [#allocation3], 1
    %649 = vsyncpa [#allocation6], 1
    %650 = vsyncpa [#allocation9], 1
    %651 = vsyncpa [#allocation4], 1

</llo_original>
